<compile_context>
chip_gen: v7x
topology: tpu7x:2x2x1
jax: 0.10.0
libtpu: 0.0.40
codegen_flags: <defaults>
</compile_context>

<pallas_src>
import jax
import jax.numpy as jnp
from jax.experimental import pallas as pl


def rnn_kernel(x_ref, wih_ref, whh_ref, b_ref, wfc_ref, bfc_ref, out_ref):
    B, T, I = x_ref.shape
    H = whh_ref.shape[0]

    # Hoisted input projection for ALL timesteps: one MXU matmul + one bias add.
    # Row order is b*T + t (batch-major), T == 8 aligns with the sublane tile.
    x_all = x_ref[...].reshape(B * T, I)                               # (B*T, I)
    xp = (jnp.dot(x_all, wih_ref[...], preferred_element_type=jnp.float32)
          + b_ref[...])                                                # (B*T, H)
    xp = xp.reshape(B, T, H)                                           # (B, T, H)

    whh = whh_ref[...]                                                 # (H, H) resident
    h = jnp.zeros((B, H), jnp.float32)

    # Serial recurrence: only h @ W_hh^T + tanh sits on the critical path.
    # Fully unrolled (static T, tiny live ranges) => straight-line code.
    for t in range(T):
        h = jnp.tanh(xp[:, t, :]
                     + jnp.dot(h, whh, preferred_element_type=jnp.float32))

    # Fused final Linear on the last hidden state (lane-padded output slab).
    out_ref[...] = (jnp.dot(h, wfc_ref[...], preferred_element_type=jnp.float32)
                    + bfc_ref[...]).astype(out_ref.dtype)


def simple_rnn_forward(x, w_ih, w_hh, b_ih, b_hh, w_fc, b_fc):
    """x: (B, T, I) float32, batch_first like PyTorch.  Weights follow PyTorch
    conventions: w_ih (H, I), w_hh (H, H), b_ih/b_hh (H,), w_fc (O, H), b_fc (O,)."""
    B, T, I = x.shape
    H = w_hh.shape[0]
    O = w_fc.shape[0]
    O_pad = max(128, pl.cdiv(O, 128) * 128)     # lane-dense output width

    wih_t = jnp.transpose(w_ih)                                         # (I, H)
    whh_t = jnp.transpose(w_hh)                                         # (H, H)
    b_comb = (b_ih + b_hh).reshape(1, H)                                # (1, H)
    wfc_t = jnp.pad(jnp.transpose(w_fc), ((0, 0), (0, O_pad - O)))      # (H, O_pad)
    bfc_p = jnp.pad(b_fc.reshape(1, O), ((0, 0), (0, O_pad - O)))       # (1, O_pad)

    out_padded = pl.pallas_call(
        rnn_kernel,
        out_shape=jax.ShapeDtypeStruct((B, O_pad), jnp.float32),
        in_specs=[
            pl.BlockSpec((B, T, I), lambda: (0, 0, 0)),   # full x, one DMA
            pl.BlockSpec((I, H), lambda: (0, 0)),         # W_ih^T
            pl.BlockSpec((H, H), lambda: (0, 0)),         # W_hh^T
            pl.BlockSpec((1, H), lambda: (0, 0)),         # b_ih + b_hh
            pl.BlockSpec((H, O_pad), lambda: (0, 0)),     # W_fc^T (lane-padded)
            pl.BlockSpec((1, O_pad), lambda: (0, 0)),     # b_fc   (lane-padded)
        ],
        out_specs=pl.BlockSpec((B, O_pad), lambda: (0, 0)),
    )(x, wih_t, whh_t, b_comb, wfc_t, bfc_p)

    return out_padded[:, :O]


def reference_forward(x, w_ih, w_hh, b_ih, b_hh, w_fc, b_fc):
    B, T, I = x.shape
    H = w_hh.shape[0]
    h = jnp.zeros((B, H), jnp.float32)
    for t in range(T):
        h = jnp.tanh(x[:, t, :] @ w_ih.T + b_ih + h @ w_hh.T + b_hh)
    return h @ w_fc.T + b_fc


if __name__ == "__main__":
    # hidden_size=64, output_size=2 from the module; small B/T/I for the test.
    B, T, I, H, O = 2, 8, 16, 64, 2

    key = jax.random.PRNGKey(0)
    kx, k1, k2, k3, k4, k5, k6 = jax.random.split(key, 7)

    # Deterministic params, PyTorch-style uniform(-1/sqrt(H), 1/sqrt(H)).
    s = 1.0 / jnp.sqrt(jnp.float32(H))
    x = jax.random.normal(kx, (B, T, I), jnp.float32)
    w_ih = jax.random.uniform(k1, (H, I), jnp.float32, -s, s)
    w_hh = jax.random.uniform(k2, (H, H), jnp.float32, -s, s)
    b_ih = jax.random.uniform(k3, (H,), jnp.float32, -s, s)
    b_hh = jax.random.uniform(k4, (H,), jnp.float32, -s, s)
    w_fc = jax.random.uniform(k5, (O, H), jnp.float32, -s, s)
    b_fc = jax.random.uniform(k6, (O,), jnp.float32, -s, s)

    out = simple_rnn_forward(x, w_ih, w_hh, b_ih, b_hh, w_fc, b_fc)
    out = jax.block_until_ready(out)

    ref = reference_forward(x, w_ih, w_hh, b_ih, b_hh, w_fc, b_fc)
    assert out.shape == (B, O)
    assert jnp.allclose(out, ref, atol=1e-5, rtol=1e-5), "mismatch vs reference"

    print("KERNEL_OK")
</pallas_src>

<mosaic_0001>
module attributes {stable_mosaic.version = 11 : i64} {
  func.func @rnn_kernel(%arg0: memref<2x8x16xf32, #tpu.memory_space<vmem>>, %arg1: memref<16x64xf32, #tpu.memory_space<vmem>>, %arg2: memref<64x64xf32, #tpu.memory_space<vmem>>, %arg3: memref<1x64xf32, #tpu.memory_space<vmem>>, %arg4: memref<64x128xf32, #tpu.memory_space<vmem>>, %arg5: memref<1x128xf32, #tpu.memory_space<vmem>>, %arg6: memref<2x128xf32, #tpu.memory_space<vmem>>) attributes {dimension_semantics = [], scalar_prefetch = 0 : i64, scratch_operands = 0 : i64, tpu.core_type = #tpu.core_type<tc>} {
    %c0 = arith.constant 0 : index
    %c0_0 = arith.constant 0 : index
    %c0_1 = arith.constant 0 : index
    %0 = vector.load %arg0[%c0, %c0_0, %c0_1] : memref<2x8x16xf32, #tpu.memory_space<vmem>>, vector<2x8x16xf32>
    %1 = vector.shape_cast %0 : vector<2x8x16xf32> to vector<16x16xf32>
    %c0_2 = arith.constant 0 : index
    %c0_3 = arith.constant 0 : index
    %2 = vector.load %arg1[%c0_2, %c0_3] : memref<16x64xf32, #tpu.memory_space<vmem>>, vector<16x64xf32>
    %cst = arith.constant dense<0.000000e+00> : vector<16x64xf32>
    %3 = tpu.matmul %1, %2, %cst {dimension_numbers = #tpu.dot_dimension_numbers<[1], [0], [0], [1], [0, 0, 1, 1], [], []>} : vector<16x16xf32>, vector<16x64xf32>, vector<16x64xf32> -> vector<16x64xf32>
    %c0_4 = arith.constant 0 : index
    %c0_5 = arith.constant 0 : index
    %4 = vector.load %arg3[%c0_4, %c0_5] : memref<1x64xf32, #tpu.memory_space<vmem>>, vector<1x64xf32>
    %5 = vector.broadcast %4 : vector<1x64xf32> to vector<16x64xf32>
    %6 = arith.addf %3, %5 : vector<16x64xf32>
    %7 = vector.shape_cast %6 : vector<16x64xf32> to vector<2x8x64xf32>
    %c0_6 = arith.constant 0 : index
    %c0_7 = arith.constant 0 : index
    %8 = vector.load %arg2[%c0_6, %c0_7] : memref<64x64xf32, #tpu.memory_space<vmem>>, vector<64x64xf32>
    %cst_8 = arith.constant 0.000000e+00 : f32
    %9 = vector.broadcast %cst_8 : f32 to vector<2x64xf32>
    %10 = vector.extract_strided_slice %7 {offsets = [0, 0, 0], sizes = [2, 1, 64], strides = [1, 1, 1]} : vector<2x8x64xf32> to vector<2x1x64xf32>
    %11 = vector.shape_cast %10 : vector<2x1x64xf32> to vector<2x64xf32>
    %cst_9 = arith.constant dense<0.000000e+00> : vector<2x64xf32>
    %12 = tpu.matmul %9, %8, %cst_9 {dimension_numbers = #tpu.dot_dimension_numbers<[1], [0], [0], [1], [0, 0, 1, 1], [], []>} : vector<2x64xf32>, vector<64x64xf32>, vector<2x64xf32> -> vector<2x64xf32>
    %13 = arith.addf %11, %12 : vector<2x64xf32>
    %14 = math.tanh %13 : vector<2x64xf32>
    %15 = vector.extract_strided_slice %7 {offsets = [0, 1, 0], sizes = [2, 1, 64], strides = [1, 1, 1]} : vector<2x8x64xf32> to vector<2x1x64xf32>
    %16 = vector.shape_cast %15 : vector<2x1x64xf32> to vector<2x64xf32>
    %cst_10 = arith.constant dense<0.000000e+00> : vector<2x64xf32>
    %17 = tpu.matmul %14, %8, %cst_10 {dimension_numbers = #tpu.dot_dimension_numbers<[1], [0], [0], [1], [0, 0, 1, 1], [], []>} : vector<2x64xf32>, vector<64x64xf32>, vector<2x64xf32> -> vector<2x64xf32>
    %18 = arith.addf %16, %17 : vector<2x64xf32>
    %19 = math.tanh %18 : vector<2x64xf32>
    %20 = vector.extract_strided_slice %7 {offsets = [0, 2, 0], sizes = [2, 1, 64], strides = [1, 1, 1]} : vector<2x8x64xf32> to vector<2x1x64xf32>
    %21 = vector.shape_cast %20 : vector<2x1x64xf32> to vector<2x64xf32>
    %cst_11 = arith.constant dense<0.000000e+00> : vector<2x64xf32>
    %22 = tpu.matmul %19, %8, %cst_11 {dimension_numbers = #tpu.dot_dimension_numbers<[1], [0], [0], [1], [0, 0, 1, 1], [], []>} : vector<2x64xf32>, vector<64x64xf32>, vector<2x64xf32> -> vector<2x64xf32>
    %23 = arith.addf %21, %22 : vector<2x64xf32>
    %24 = math.tanh %23 : vector<2x64xf32>
    %25 = vector.extract_strided_slice %7 {offsets = [0, 3, 0], sizes = [2, 1, 64], strides = [1, 1, 1]} : vector<2x8x64xf32> to vector<2x1x64xf32>
    %26 = vector.shape_cast %25 : vector<2x1x64xf32> to vector<2x64xf32>
    %cst_12 = arith.constant dense<0.000000e+00> : vector<2x64xf32>
    %27 = tpu.matmul %24, %8, %cst_12 {dimension_numbers = #tpu.dot_dimension_numbers<[1], [0], [0], [1], [0, 0, 1, 1], [], []>} : vector<2x64xf32>, vector<64x64xf32>, vector<2x64xf32> -> vector<2x64xf32>
    %28 = arith.addf %26, %27 : vector<2x64xf32>
    %29 = math.tanh %28 : vector<2x64xf32>
    %30 = vector.extract_strided_slice %7 {offsets = [0, 4, 0], sizes = [2, 1, 64], strides = [1, 1, 1]} : vector<2x8x64xf32> to vector<2x1x64xf32>
    %31 = vector.shape_cast %30 : vector<2x1x64xf32> to vector<2x64xf32>
    %cst_13 = arith.constant dense<0.000000e+00> : vector<2x64xf32>
    %32 = tpu.matmul %29, %8, %cst_13 {dimension_numbers = #tpu.dot_dimension_numbers<[1], [0], [0], [1], [0, 0, 1, 1], [], []>} : vector<2x64xf32>, vector<64x64xf32>, vector<2x64xf32> -> vector<2x64xf32>
    %33 = arith.addf %31, %32 : vector<2x64xf32>
    %34 = math.tanh %33 : vector<2x64xf32>
    %35 = vector.extract_strided_slice %7 {offsets = [0, 5, 0], sizes = [2, 1, 64], strides = [1, 1, 1]} : vector<2x8x64xf32> to vector<2x1x64xf32>
    %36 = vector.shape_cast %35 : vector<2x1x64xf32> to vector<2x64xf32>
    %cst_14 = arith.constant dense<0.000000e+00> : vector<2x64xf32>
    %37 = tpu.matmul %34, %8, %cst_14 {dimension_numbers = #tpu.dot_dimension_numbers<[1], [0], [0], [1], [0, 0, 1, 1], [], []>} : vector<2x64xf32>, vector<64x64xf32>, vector<2x64xf32> -> vector<2x64xf32>
    %38 = arith.addf %36, %37 : vector<2x64xf32>
    %39 = math.tanh %38 : vector<2x64xf32>
    %40 = vector.extract_strided_slice %7 {offsets = [0, 6, 0], sizes = [2, 1, 64], strides = [1, 1, 1]} : vector<2x8x64xf32> to vector<2x1x64xf32>
    %41 = vector.shape_cast %40 : vector<2x1x64xf32> to vector<2x64xf32>
    %cst_15 = arith.constant dense<0.000000e+00> : vector<2x64xf32>
    %42 = tpu.matmul %39, %8, %cst_15 {dimension_numbers = #tpu.dot_dimension_numbers<[1], [0], [0], [1], [0, 0, 1, 1], [], []>} : vector<2x64xf32>, vector<64x64xf32>, vector<2x64xf32> -> vector<2x64xf32>
    %43 = arith.addf %41, %42 : vector<2x64xf32>
    %44 = math.tanh %43 : vector<2x64xf32>
    %45 = vector.extract_strided_slice %7 {offsets = [0, 7, 0], sizes = [2, 1, 64], strides = [1, 1, 1]} : vector<2x8x64xf32> to vector<2x1x64xf32>
    %46 = vector.shape_cast %45 : vector<2x1x64xf32> to vector<2x64xf32>
    %cst_16 = arith.constant dense<0.000000e+00> : vector<2x64xf32>
    %47 = tpu.matmul %44, %8, %cst_16 {dimension_numbers = #tpu.dot_dimension_numbers<[1], [0], [0], [1], [0, 0, 1, 1], [], []>} : vector<2x64xf32>, vector<64x64xf32>, vector<2x64xf32> -> vector<2x64xf32>
    %48 = arith.addf %46, %47 : vector<2x64xf32>
    %49 = math.tanh %48 : vector<2x64xf32>
    %c0_17 = arith.constant 0 : index
    %c0_18 = arith.constant 0 : index
    %50 = vector.load %arg4[%c0_17, %c0_18] : memref<64x128xf32, #tpu.memory_space<vmem>>, vector<64x128xf32>
    %cst_19 = arith.constant dense<0.000000e+00> : vector<2x128xf32>
    %51 = tpu.matmul %49, %50, %cst_19 {dimension_numbers = #tpu.dot_dimension_numbers<[1], [0], [0], [1], [0, 0, 1, 1], [], []>} : vector<2x64xf32>, vector<64x128xf32>, vector<2x128xf32> -> vector<2x128xf32>
    %c0_20 = arith.constant 0 : index
    %c0_21 = arith.constant 0 : index
    %52 = vector.load %arg5[%c0_20, %c0_21] : memref<1x128xf32, #tpu.memory_space<vmem>>, vector<1x128xf32>
    %53 = vector.broadcast %52 : vector<1x128xf32> to vector<2x128xf32>
    %54 = arith.addf %51, %53 : vector<2x128xf32>
    %c0_22 = arith.constant 0 : index
    %c0_23 = arith.constant 0 : index
    %55 = vector.load %arg6[%c0_22, %c0_23] : memref<2x128xf32, #tpu.memory_space<vmem>>, vector<2x128xf32>
    tpu.vector_store %arg6[%c0_22, %c0_23], %54 {strides = array<i32>} : memref<2x128xf32, #tpu.memory_space<vmem>>, vector<2x128xf32>,
    return
  }
}

</mosaic_0001>

<llo_original>
// kernel: tpu_custom_call.1
$region0: #{tpu_custom_call.1}
  #allocation0 [shape = 'u32[]', space=smem, size = 0x4, offset = 0x4, fixed_abs, tag = 'smem constant byte address 0x4 - core index']
  #allocation1 [shape = 'u32[144,128]{1,0:T(1,128)}', space=vmem, size = 0x12000, scoped, tag = 'internal scratch']
  %s0 = inlined_call_operand.hbm [shape: f32[2,8,16], index: 0, kind: input, shape index: {}]
  %s1 = inlined_call_operand.hbm [shape: f32[16,64], index: 1, kind: input, shape index: {}]
  %s2 = inlined_call_operand.hbm [shape: f32[64,64], index: 2, kind: input, shape index: {}]
  %s3 = inlined_call_operand.vmem [shape: f32[1,64], index: 3, kind: input, shape index: {}]
  %s4 = inlined_call_operand.hbm [shape: f32[64,128], index: 4, kind: input, shape index: {}]
  %s5 = inlined_call_operand.vmem [shape: f32[1,128], index: 5, kind: input, shape index: {}]
  %s6 = inlined_call_operand.hbm [shape: f32[2,128], index: 6, kind: output, shape index: {}]
  %s7 = sld [smem:[#allocation0]]
  $region50: #{tpu_custom_call.1} parent=0
    _
  %s9 = ssub.s32 1, %s7
  %s10 = scalar_select 0, %s9, %s7
  $region1: #{tpu_custom_call.1} parent=0
    #allocation2 [shape = 'u8[8192]{0}', space=vmem, size = 0x2000, scoped, tag = 'input window, operand 0, single buffered']
    #allocation3 [shape = 's32[1]{0}', space=sflag, size = 0x4, scoped, tag = 'scoped memory for tpu_custom_call.1']
    #allocation4 [shape = 's32[1]{0}', space=sflag, size = 0x4, scoped, tag = 'scoped memory for tpu_custom_call.1']
    #allocation5 [shape = 'u8[8192]{0}', space=vmem, size = 0x2000, scoped, tag = 'input window, operand 1, single buffered']
    #allocation6 [shape = 's32[1]{0}', space=sflag, size = 0x4, scoped, tag = 'scoped memory for tpu_custom_call.1']
    #allocation7 [shape = 'u8[32768]{0}', space=vmem, size = 0x8000, scoped, tag = 'input window, operand 2, single buffered']
    #allocation8 [shape = 'u8[32768]{0}', space=vmem, size = 0x8000, scoped, tag = 'input window, operand 4, single buffered']
    #allocation9 [shape = 's32[1]{0}', space=sflag, size = 0x4, scoped, tag = 'scoped memory for tpu_custom_call.1']
    #allocation10 [shape = 'u8[1024]{0}', space=vmem, size = 0x400, scoped, tag = 'output window, operand 0, single buffered']
    %11 = vsyncpa [#allocation3], 0
    %12 = vsyncpa [#allocation6], 0
    %13 = vsyncpa [#allocation9], 0
    %14 = vsyncpa [#allocation4], 0
    // Predicated region
    $region2: #{tpu_custom_call.1} parent=1 // pred_check
      _
    $region3: #{tpu_custom_call.1} parent=1 // pred_check_branch
      %16 = sbr.rel (0) target = $region5
    $region4: #{tpu_custom_call.1} parent=1 // pred_region
      %s18 = ssub.s32 256, 256
      %19 = vsyncadd [#allocation3], %s18
      %s20 = sshll.u32 [#allocation2], 4
      %s21 = int_to_ptr.vmem [resolvable:$true] %s20
      %26 = dma.hbm_to_vmem [thread:$0]  %s0, 256, %s21, [#allocation3], 128, 128, 8
    $region5: #{tpu_custom_call.1} parent=1 // pred_fallthru
      _
    // Predicated region
    $region6: #{tpu_custom_call.1} parent=1 // pred_check
      _
    $region7: #{tpu_custom_call.1} parent=1 // pred_check_branch
      %28 = sbr.rel (0) target = $region9
    $region8: #{tpu_custom_call.1} parent=1 // pred_region
      %s30 = ssub.s32 256, 256
      %31 = vsyncadd [#allocation6], %s30
      %s32 = sshll.u32 [#allocation5], 4
      %s33 = int_to_ptr.vmem [resolvable:$true] %s32
      %38 = dma.hbm_to_vmem [thread:$0]  %s1, 256, %s33, [#allocation6], 128, 128, 8
    $region9: #{tpu_custom_call.1} parent=1 // pred_fallthru
      _
    // Predicated region
    $region10: #{tpu_custom_call.1} parent=1 // pred_check
      _
    $region11: #{tpu_custom_call.1} parent=1 // pred_check_branch
      %40 = sbr.rel (0) target = $region13
    $region12: #{tpu_custom_call.1} parent=1 // pred_region
      %s42 = ssub.s32 1024, 1024
      %43 = vsyncadd [#allocation6], %s42
      %s44 = sshll.u32 [#allocation7], 4
      %s45 = int_to_ptr.vmem [resolvable:$true] %s44
      %50 = dma.hbm_to_vmem [thread:$0]  %s2, 1024, %s45, [#allocation6], 128, 128, 8
    $region13: #{tpu_custom_call.1} parent=1 // pred_fallthru
      _
    // Predicated region
    $region14: #{tpu_custom_call.1} parent=1 // pred_check
      _
    $region15: #{tpu_custom_call.1} parent=1 // pred_check_branch
      %52 = sbr.rel (0) target = $region17
    $region16: #{tpu_custom_call.1} parent=1 // pred_region
      _
    $region17: #{tpu_custom_call.1} parent=1 // pred_fallthru
      _
    // Predicated region
    $region18: #{tpu_custom_call.1} parent=1 // pred_check
      _
    $region19: #{tpu_custom_call.1} parent=1 // pred_check_branch
      %54 = sbr.rel (0) target = $region21
    $region20: #{tpu_custom_call.1} parent=1 // pred_region
      %s56 = ssub.s32 1024, 1024
      %57 = vsyncadd [#allocation9], %s56
      %s58 = sshll.u32 [#allocation8], 4
      %s59 = int_to_ptr.vmem [resolvable:$true] %s58
      %64 = dma.hbm_to_vmem [thread:$0]  %s4, 1024, %s59, [#allocation9], 128, 128, 8
    $region21: #{tpu_custom_call.1} parent=1 // pred_fallthru
      _
    // Predicated region
    $region22: #{tpu_custom_call.1} parent=1 // pred_check
      _
    $region23: #{tpu_custom_call.1} parent=1 // pred_check_branch
      %66 = sbr.rel (0) target = $region25
    $region24: #{tpu_custom_call.1} parent=1 // pred_region
      _
    $region25: #{tpu_custom_call.1} parent=1 // pred_fallthru
      _
    // Predicated region
    $region26: #{tpu_custom_call.1} parent=1 // pred_check
      _
    $region27: #{tpu_custom_call.1} parent=1 // pred_check_branch
      %68 = sbr.rel (0) target = $region29
    $region28: #{tpu_custom_call.1} parent=1 // pred_region
      %69 = dma.done [#allocation3], 256
    $region29: #{tpu_custom_call.1} parent=1 // pred_fallthru
      _
    // Predicated region
    $region30: #{tpu_custom_call.1} parent=1 // pred_check
      _
    $region31: #{tpu_custom_call.1} parent=1 // pred_check_branch
      %71 = sbr.rel (0) target = $region33
    $region32: #{tpu_custom_call.1} parent=1 // pred_region
      %72 = dma.done [#allocation6], 256
    $region33: #{tpu_custom_call.1} parent=1 // pred_fallthru
      _
    // Predicated region
    $region34: #{tpu_custom_call.1} parent=1 // pred_check
      _
    $region35: #{tpu_custom_call.1} parent=1 // pred_check_branch
      %74 = sbr.rel (0) target = $region37
    $region36: #{tpu_custom_call.1} parent=1 // pred_region
      %75 = dma.done [#allocation6], 1024
    $region37: #{tpu_custom_call.1} parent=1 // pred_fallthru
      _
    // Predicated region
    $region38: #{tpu_custom_call.1} parent=1 // pred_check
      _
    $region39: #{tpu_custom_call.1} parent=1 // pred_check_branch
      %77 = sbr.rel (0) target = $region41
    $region40: #{tpu_custom_call.1} parent=1 // pred_region
      %78 = dma.done [#allocation9], 1024
    $region41: #{tpu_custom_call.1} parent=1 // pred_fallthru
      _
    %v79 = vld [vmem:[#allocation2] sm:$0xff]
    %v80 = vld [vmem:[#allocation2 + $0x8] sm:$0xff]
    %v81 = vld [vmem:[#allocation5] sm:$0xff]
    %v82 = vld [vmem:[#allocation5 + $0x8] sm:$0xff]
    %v83 = vld [vmem:[%s3] sm:$0x1]
    %v85 = vlaneseq
    %v86 = vshrl.u32 %v85, 7
    %v87 = vsub.s32 0, %v86
    %v88 = vrot.slane %v83, %v87
    %vm90 = vcmask 130048
    %v92 = vsel %vm90, %v79, 0
    %v95 = vsel %vm90, %v80, 0
    %97 = vmatprep.subr.mxu0 0.0
    %98 = vmatpush1.msra.mxu0 %v81
    %99 = vmatprep.subr.mxu0 0.0
    %100 = vmatpush1.msra.mxu0 %v82
    %101 = vmatprep.subr.mxu0 0.0
    %102 = vmatpush1.msra.mxu0 0.0
    %103 = vmatprep.subr.mxu0 0.0
    %104 = vmatpush1.msra.mxu0 0.0
    %105 = vmatprep.subr.mxu0 0.0
    %106 = vmatpush1.msra.mxu0 0.0
    %107 = vmatprep.subr.mxu0 0.0
    %108 = vmatpush1.msra.mxu0 0.0
    %109 = vmatprep.subr.mxu0 0.0
    %110 = vmatpush1.msra.mxu0 0.0
    %111 = vmatprep.subr.mxu0 0.0
    %112 = vmatpush1.msra.mxu0 0.0
    %113 = vmatprep.subr.mxu0 0.0
    %114 = vmatpush1.msra.mxu0 0.0
    %115 = vmatprep.subr.mxu0 0.0
    %116 = vmatpush1.msra.mxu0 0.0
    %117 = vmatprep.subr.mxu0 0.0
    %118 = vmatpush1.msra.mxu0 0.0
    %119 = vmatprep.subr.mxu0 0.0
    %120 = vmatpush1.msra.mxu0 0.0
    %121 = vmatprep.subr.mxu0 0.0
    %122 = vmatpush1.msra.mxu0 0.0
    %123 = vmatprep.subr.mxu0 0.0
    %124 = vmatpush1.msra.mxu0 0.0
    %125 = vmatprep.subr.mxu0 0.0
    %126 = vmatpush1.msra.mxu0 0.0
    %127 = vmatprep.subr.mxu0 0.0
    %128 = vmatpush1.msra.mxu0 0.0
    %129 = vmatprep.subr.mxu0 0.0
    %130 = vmatpush1.msra.mxu0 0.0
    %131 = vmatprep.subr.mxu0 0.0
    %132 = vmatpush1.msra.mxu0 0.0
    %133 = vmatprep.subr.mxu0 0.0
    %134 = vmatpush1.msra.mxu0 0.0
    %135 = vmatprep.subr.mxu0 0.0
    %136 = vmatpush1.msra.mxu0 0.0
    %137 = vmatprep.subr.mxu0 0.0
    %138 = vmatpush1.msra.mxu0 0.0
    %139 = vmatprep.subr.mxu0 0.0
    %140 = vmatpush1.msra.mxu0 0.0
    %141 = vmatprep.subr.mxu0 0.0
    %142 = vmatpush1.msra.mxu0 0.0
    %143 = vmatprep.subr.mxu0 0.0
    %144 = vmatpush1.msra.mxu0 0.0
    %145 = vmatprep.subr.mxu0 0.0
    %146 = vmatpush1.msra.mxu0 0.0
    %147 = vmatprep.subr.mxu0 0.0
    %148 = vmatpush1.msra.mxu0 0.0
    %149 = vmatprep.subr.mxu0 0.0
    %150 = vmatpush1.msra.mxu0 0.0
    %151 = vmatprep.subr.mxu0 0.0
    %152 = vmatpush1.msra.mxu0 0.0
    %153 = vmatprep.subr.mxu0 0.0
    %154 = vmatpush1.msra.mxu0 0.0
    %155 = vmatprep.subr.mxu0 0.0
    %156 = vmatpush1.msra.mxu0 0.0
    %157 = vmatprep.subr.mxu0 0.0
    %158 = vmatpush1.msra.mxu0 0.0
    %159 = vmatprep.subr.mxu0 0.0
    %160 = vmatpush1.msra.mxu0 0.0
    %161 = vmatprep.mubr.f32.mxu0 0.0
    %162 = vmatmul.mubr.f32.gmra.mrb[0].mxu0 %v92
    %v163 = vpop.f32.mrb[0].mxu0
    %v164 = vadd.f32 %v88, %v163
    %v165 = vpop.f32.mrb[0].mxu0
    %166 = vmatprep.mubr.f32.mxu0 0.0
    %167 = vmatmul.mubr.f32.gmra.mrb[0].mxu0 %v95
    %v168 = vpop.f32.mrb[0].mxu0
    %v169 = vadd.f32 %v88, %v168
    %v170 = vpop.f32.mrb[0].mxu0
    %171 = vdwg.mxu0
    %v172 = vld [vmem:[#allocation7] sm:$0xff]
    %v173 = vld [vmem:[#allocation7 + $0x8] sm:$0xff]
    %v174 = vld [vmem:[#allocation7 + $0x10] sm:$0xff]
    %v175 = vld [vmem:[#allocation7 + $0x18] sm:$0xff]
    %v176 = vld [vmem:[#allocation7 + $0x20] sm:$0xff]
    %v177 = vld [vmem:[#allocation7 + $0x28] sm:$0xff]
    %v178 = vld [vmem:[#allocation7 + $0x30] sm:$0xff]
    %v179 = vld [vmem:[#allocation7 + $0x38] sm:$0xff]
    %vm180 = vcmask 523264
    %v182 = vsel %vm180, 0.0, 0
    %184 = vmatprep.subr.mxu0 0.0
    %185 = vmatpush1.msra.mxu0 %v172
    %186 = vmatprep.subr.mxu0 0.0
    %187 = vmatpush1.msra.mxu0 %v173
    %188 = vmatprep.subr.mxu0 0.0
    %189 = vmatpush1.msra.mxu0 %v174
    %190 = vmatprep.subr.mxu0 0.0
    %191 = vmatpush1.msra.mxu0 %v175
    %192 = vmatprep.subr.mxu0 0.0
    %193 = vmatpush1.msra.mxu0 %v176
    %194 = vmatprep.subr.mxu0 0.0
    %195 = vmatpush1.msra.mxu0 %v177
    %196 = vmatprep.subr.mxu0 0.0
    %197 = vmatpush1.msra.mxu0 %v178
    %198 = vmatprep.subr.mxu0 0.0
    %199 = vmatpush1.msra.mxu0 %v179
    %200 = vmatprep.subr.mxu0 0.0
    %201 = vmatpush1.msra.mxu0 0.0
    %202 = vmatprep.subr.mxu0 0.0
    %203 = vmatpush1.msra.mxu0 0.0
    %204 = vmatprep.subr.mxu0 0.0
    %205 = vmatpush1.msra.mxu0 0.0
    %206 = vmatprep.subr.mxu0 0.0
    %207 = vmatpush1.msra.mxu0 0.0
    %208 = vmatprep.subr.mxu0 0.0
    %209 = vmatpush1.msra.mxu0 0.0
    %210 = vmatprep.subr.mxu0 0.0
    %211 = vmatpush1.msra.mxu0 0.0
    %212 = vmatprep.subr.mxu0 0.0
    %213 = vmatpush1.msra.mxu0 0.0
    %214 = vmatprep.subr.mxu0 0.0
    %215 = vmatpush1.msra.mxu0 0.0
    %216 = vmatprep.subr.mxu0 0.0
    %217 = vmatpush1.msra.mxu0 0.0
    %218 = vmatprep.subr.mxu0 0.0
    %219 = vmatpush1.msra.mxu0 0.0
    %220 = vmatprep.subr.mxu0 0.0
    %221 = vmatpush1.msra.mxu0 0.0
    %222 = vmatprep.subr.mxu0 0.0
    %223 = vmatpush1.msra.mxu0 0.0
    %224 = vmatprep.subr.mxu0 0.0
    %225 = vmatpush1.msra.mxu0 0.0
    %226 = vmatprep.subr.mxu0 0.0
    %227 = vmatpush1.msra.mxu0 0.0
    %228 = vmatprep.subr.mxu0 0.0
    %229 = vmatpush1.msra.mxu0 0.0
    %230 = vmatprep.subr.mxu0 0.0
    %231 = vmatpush1.msra.mxu0 0.0
    %232 = vmatprep.subr.mxu0 0.0
    %233 = vmatpush1.msra.mxu0 0.0
    %234 = vmatprep.subr.mxu0 0.0
    %235 = vmatpush1.msra.mxu0 0.0
    %236 = vmatprep.subr.mxu0 0.0
    %237 = vmatpush1.msra.mxu0 0.0
    %238 = vmatprep.subr.mxu0 0.0
    %239 = vmatpush1.msra.mxu0 0.0
    %240 = vmatprep.subr.mxu0 0.0
    %241 = vmatpush1.msra.mxu0 0.0
    %242 = vmatprep.subr.mxu0 0.0
    %243 = vmatpush1.msra.mxu0 0.0
    %244 = vmatprep.subr.mxu0 0.0
    %245 = vmatpush1.msra.mxu0 0.0
    %246 = vmatprep.subr.mxu0 0.0
    %247 = vmatpush1.msra.mxu0 0.0
    %248 = vmatprep.mubr.f32.mxu0 0.0
    %249 = vmatmul.mubr.f32.gmra.mrb[0].mxu0 %v182
    %v250 = vpop.f32.mrb[0].mxu0
    %v251 = vadd.f32 0.0, %v250
    %v252 = vpop.f32.mrb[0].mxu0
    %253 = vdwg.mxu0
    %v255 = vrot.slane %v251, 1
    %v258 = vadd.f32 %v164, %v251
    %v259 = vadd.f32 %v169, %v255
    %v260 = vtanh.pop %v258
    %v261 = vtanh.pop %v259
    %v264 = vrot.slane %v261, 7
    %vm265 = vcmask 1041409
    %v266 = vsel %vm265, %v264, %v260
    %v267 = vsel %vm180, %v266, 0
    %269 = vmatprep.subr.mxu0 0.0
    %270 = vmatpush1.msra.mxu0 %v172
    %271 = vmatprep.subr.mxu0 0.0
    %272 = vmatpush1.msra.mxu0 %v173
    %273 = vmatprep.subr.mxu0 0.0
    %274 = vmatpush1.msra.mxu0 %v174
    %275 = vmatprep.subr.mxu0 0.0
    %276 = vmatpush1.msra.mxu0 %v175
    %277 = vmatprep.subr.mxu0 0.0
    %278 = vmatpush1.msra.mxu0 %v176
    %279 = vmatprep.subr.mxu0 0.0
    %280 = vmatpush1.msra.mxu0 %v177
    %281 = vmatprep.subr.mxu0 0.0
    %282 = vmatpush1.msra.mxu0 %v178
    %283 = vmatprep.subr.mxu0 0.0
    %284 = vmatpush1.msra.mxu0 %v179
    %285 = vmatprep.subr.mxu0 0.0
    %286 = vmatpush1.msra.mxu0 0.0
    %287 = vmatprep.subr.mxu0 0.0
    %288 = vmatpush1.msra.mxu0 0.0
    %289 = vmatprep.subr.mxu0 0.0
    %290 = vmatpush1.msra.mxu0 0.0
    %291 = vmatprep.subr.mxu0 0.0
    %292 = vmatpush1.msra.mxu0 0.0
    %293 = vmatprep.subr.mxu0 0.0
    %294 = vmatpush1.msra.mxu0 0.0
    %295 = vmatprep.subr.mxu0 0.0
    %296 = vmatpush1.msra.mxu0 0.0
    %297 = vmatprep.subr.mxu0 0.0
    %298 = vmatpush1.msra.mxu0 0.0
    %299 = vmatprep.subr.mxu0 0.0
    %300 = vmatpush1.msra.mxu0 0.0
    %301 = vmatprep.subr.mxu0 0.0
    %302 = vmatpush1.msra.mxu0 0.0
    %303 = vmatprep.subr.mxu0 0.0
    %304 = vmatpush1.msra.mxu0 0.0
    %305 = vmatprep.subr.mxu0 0.0
    %306 = vmatpush1.msra.mxu0 0.0
    %307 = vmatprep.subr.mxu0 0.0
    %308 = vmatpush1.msra.mxu0 0.0
    %309 = vmatprep.subr.mxu0 0.0
    %310 = vmatpush1.msra.mxu0 0.0
    %311 = vmatprep.subr.mxu0 0.0
    %312 = vmatpush1.msra.mxu0 0.0
    %313 = vmatprep.subr.mxu0 0.0
    %314 = vmatpush1.msra.mxu0 0.0
    %315 = vmatprep.subr.mxu0 0.0
    %316 = vmatpush1.msra.mxu0 0.0
    %317 = vmatprep.subr.mxu0 0.0
    %318 = vmatpush1.msra.mxu0 0.0
    %319 = vmatprep.subr.mxu0 0.0
    %320 = vmatpush1.msra.mxu0 0.0
    %321 = vmatprep.subr.mxu0 0.0
    %322 = vmatpush1.msra.mxu0 0.0
    %323 = vmatprep.subr.mxu0 0.0
    %324 = vmatpush1.msra.mxu0 0.0
    %325 = vmatprep.subr.mxu0 0.0
    %326 = vmatpush1.msra.mxu0 0.0
    %327 = vmatprep.subr.mxu0 0.0
    %328 = vmatpush1.msra.mxu0 0.0
    %329 = vmatprep.subr.mxu0 0.0
    %330 = vmatpush1.msra.mxu0 0.0
    %331 = vmatprep.subr.mxu0 0.0
    %332 = vmatpush1.msra.mxu0 0.0
    %333 = vmatprep.mubr.f32.mxu0 0.0
    %334 = vmatmul.mubr.f32.gmra.mrb[0].mxu0 %v267
    %v335 = vpop.f32.mrb[0].mxu0
    %v336 = vadd.f32 0.0, %v335
    %v337 = vpop.f32.mrb[0].mxu0
    %338 = vdwg.mxu0
    %v340 = vrot.slane %v336, 7
    %v343 = vadd.f32 %v164, %v340
    %v344 = vadd.f32 %v169, %v336
    %v345 = vtanh.pop %v343
    %v346 = vtanh.pop %v344
    %v349 = vrot.slane %v345, 1
    %v350 = vsel %vm265, %v346, %v349
    %v351 = vsel %vm180, %v350, 0
    %353 = vmatprep.subr.mxu0 0.0
    %354 = vmatpush1.msra.mxu0 %v172
    %355 = vmatprep.subr.mxu0 0.0
    %356 = vmatpush1.msra.mxu0 %v173
    %357 = vmatprep.subr.mxu0 0.0
    %358 = vmatpush1.msra.mxu0 %v174
    %359 = vmatprep.subr.mxu0 0.0
    %360 = vmatpush1.msra.mxu0 %v175
    %361 = vmatprep.subr.mxu0 0.0
    %362 = vmatpush1.msra.mxu0 %v176
    %363 = vmatprep.subr.mxu0 0.0
    %364 = vmatpush1.msra.mxu0 %v177
    %365 = vmatprep.subr.mxu0 0.0
    %366 = vmatpush1.msra.mxu0 %v178
    %367 = vmatprep.subr.mxu0 0.0
    %368 = vmatpush1.msra.mxu0 %v179
    %369 = vmatprep.subr.mxu0 0.0
    %370 = vmatpush1.msra.mxu0 0.0
    %371 = vmatprep.subr.mxu0 0.0
    %372 = vmatpush1.msra.mxu0 0.0
    %373 = vmatprep.subr.mxu0 0.0
    %374 = vmatpush1.msra.mxu0 0.0
    %375 = vmatprep.subr.mxu0 0.0
    %376 = vmatpush1.msra.mxu0 0.0
    %377 = vmatprep.subr.mxu0 0.0
    %378 = vmatpush1.msra.mxu0 0.0
    %379 = vmatprep.subr.mxu0 0.0
    %380 = vmatpush1.msra.mxu0 0.0
    %381 = vmatprep.subr.mxu0 0.0
    %382 = vmatpush1.msra.mxu0 0.0
    %383 = vmatprep.subr.mxu0 0.0
    %384 = vmatpush1.msra.mxu0 0.0
    %385 = vmatprep.subr.mxu0 0.0
    %386 = vmatpush1.msra.mxu0 0.0
    %387 = vmatprep.subr.mxu0 0.0
    %388 = vmatpush1.msra.mxu0 0.0
    %389 = vmatprep.subr.mxu0 0.0
    %390 = vmatpush1.msra.mxu0 0.0
    %391 = vmatprep.subr.mxu0 0.0
    %392 = vmatpush1.msra.mxu0 0.0
    %393 = vmatprep.subr.mxu0 0.0
    %394 = vmatpush1.msra.mxu0 0.0
    %395 = vmatprep.subr.mxu0 0.0
    %396 = vmatpush1.msra.mxu0 0.0
    %397 = vmatprep.subr.mxu0 0.0
    %398 = vmatpush1.msra.mxu0 0.0
    %399 = vmatprep.subr.mxu0 0.0
    %400 = vmatpush1.msra.mxu0 0.0
    %401 = vmatprep.subr.mxu0 0.0
    %402 = vmatpush1.msra.mxu0 0.0
    %403 = vmatprep.subr.mxu0 0.0
    %404 = vmatpush1.msra.mxu0 0.0
    %405 = vmatprep.subr.mxu0 0.0
    %406 = vmatpush1.msra.mxu0 0.0
    %407 = vmatprep.subr.mxu0 0.0
    %408 = vmatpush1.msra.mxu0 0.0
    %409 = vmatprep.subr.mxu0 0.0
    %410 = vmatpush1.msra.mxu0 0.0
    %411 = vmatprep.subr.mxu0 0.0
    %412 = vmatpush1.msra.mxu0 0.0
    %413 = vmatprep.subr.mxu0 0.0
    %414 = vmatpush1.msra.mxu0 0.0
    %415 = vmatprep.subr.mxu0 0.0
    %416 = vmatpush1.msra.mxu0 0.0
    %417 = vmatprep.mubr.f32.mxu0 0.0
    %418 = vmatmul.mubr.f32.gmra.mrb[0].mxu0 %v351
    %v419 = vpop.f32.mrb[0].mxu0
    %v420 = vadd.f32 0.0, %v419
    %v421 = vpop.f32.mrb[0].mxu0
    %422 = vdwg.mxu0
    %v424 = vrot.slane %v420, 6
    %v425 = vrot.slane %v420, 7
    %v428 = vadd.f32 %v164, %v424
    %v429 = vadd.f32 %v169, %v425
    %v430 = vtanh.pop %v428
    %v431 = vtanh.pop %v429
    %v434 = vrot.slane %v430, 2
    %v435 = vrot.slane %v431, 1
    %v436 = vsel %vm265, %v435, %v434
    %v437 = vsel %vm180, %v436, 0
    %439 = vmatprep.subr.mxu0 0.0
    %440 = vmatpush1.msra.mxu0 %v172
    %441 = vmatprep.subr.mxu0 0.0
    %442 = vmatpush1.msra.mxu0 %v173
    %443 = vmatprep.subr.mxu0 0.0
    %444 = vmatpush1.msra.mxu0 %v174
    %445 = vmatprep.subr.mxu0 0.0
    %446 = vmatpush1.msra.mxu0 %v175
    %447 = vmatprep.subr.mxu0 0.0
    %448 = vmatpush1.msra.mxu0 %v176
    %449 = vmatprep.subr.mxu0 0.0
    %450 = vmatpush1.msra.mxu0 %v177
    %451 = vmatprep.subr.mxu0 0.0
    %452 = vmatpush1.msra.mxu0 %v178
    %453 = vmatprep.subr.mxu0 0.0
    %454 = vmatpush1.msra.mxu0 %v179
    %455 = vmatprep.subr.mxu0 0.0
    %456 = vmatpush1.msra.mxu0 0.0
    %457 = vmatprep.subr.mxu0 0.0
    %458 = vmatpush1.msra.mxu0 0.0
    %459 = vmatprep.subr.mxu0 0.0
    %460 = vmatpush1.msra.mxu0 0.0
    %461 = vmatprep.subr.mxu0 0.0
    %462 = vmatpush1.msra.mxu0 0.0
    %463 = vmatprep.subr.mxu0 0.0
    %464 = vmatpush1.msra.mxu0 0.0
    %465 = vmatprep.subr.mxu0 0.0
    %466 = vmatpush1.msra.mxu0 0.0
    %467 = vmatprep.subr.mxu0 0.0
    %468 = vmatpush1.msra.mxu0 0.0
    %469 = vmatprep.subr.mxu0 0.0
    %470 = vmatpush1.msra.mxu0 0.0
    %471 = vmatprep.subr.mxu0 0.0
    %472 = vmatpush1.msra.mxu0 0.0
    %473 = vmatprep.subr.mxu0 0.0
    %474 = vmatpush1.msra.mxu0 0.0
    %475 = vmatprep.subr.mxu0 0.0
    %476 = vmatpush1.msra.mxu0 0.0
    %477 = vmatprep.subr.mxu0 0.0
    %478 = vmatpush1.msra.mxu0 0.0
    %479 = vmatprep.subr.mxu0 0.0
    %480 = vmatpush1.msra.mxu0 0.0
    %481 = vmatprep.subr.mxu0 0.0
    %482 = vmatpush1.msra.mxu0 0.0
    %483 = vmatprep.subr.mxu0 0.0
    %484 = vmatpush1.msra.mxu0 0.0
    %485 = vmatprep.subr.mxu0 0.0
    %486 = vmatpush1.msra.mxu0 0.0
    %487 = vmatprep.subr.mxu0 0.0
    %488 = vmatpush1.msra.mxu0 0.0
    %489 = vmatprep.subr.mxu0 0.0
    %490 = vmatpush1.msra.mxu0 0.0
    %491 = vmatprep.subr.mxu0 0.0
    %492 = vmatpush1.msra.mxu0 0.0
    %493 = vmatprep.subr.mxu0 0.0
    %494 = vmatpush1.msra.mxu0 0.0
    %495 = vmatprep.subr.mxu0 0.0
    %496 = vmatpush1.msra.mxu0 0.0
    %497 = vmatprep.subr.mxu0 0.0
    %498 = vmatpush1.msra.mxu0 0.0
    %499 = vmatprep.subr.mxu0 0.0
    %500 = vmatpush1.msra.mxu0 0.0
    %501 = vmatprep.subr.mxu0 0.0
    %502 = vmatpush1.msra.mxu0 0.0
    %503 = vmatprep.mubr.f32.mxu0 0.0
    %504 = vmatmul.mubr.f32.gmra.mrb[0].mxu0 %v437
    %v505 = vpop.f32.mrb[0].mxu0
    %v506 = vadd.f32 0.0, %v505
    %v507 = vpop.f32.mrb[0].mxu0
    %508 = vdwg.mxu0
    %v510 = vrot.slane %v506, 5
    %v511 = vrot.slane %v506, 6
    %v514 = vadd.f32 %v164, %v510
    %v515 = vadd.f32 %v169, %v511
    %v516 = vtanh.pop %v514
    %v517 = vtanh.pop %v515
    %v520 = vrot.slane %v516, 3
    %v521 = vrot.slane %v517, 2
    %v522 = vsel %vm265, %v521, %v520
    %v523 = vsel %vm180, %v522, 0
    %525 = vmatprep.subr.mxu0 0.0
    %526 = vmatpush1.msra.mxu0 %v172
    %527 = vmatprep.subr.mxu0 0.0
    %528 = vmatpush1.msra.mxu0 %v173
    %529 = vmatprep.subr.mxu0 0.0
    %530 = vmatpush1.msra.mxu0 %v174
    %531 = vmatprep.subr.mxu0 0.0
    %532 = vmatpush1.msra.mxu0 %v175
    %533 = vmatprep.subr.mxu0 0.0
    %534 = vmatpush1.msra.mxu0 %v176
    %535 = vmatprep.subr.mxu0 0.0
    %536 = vmatpush1.msra.mxu0 %v177
    %537 = vmatprep.subr.mxu0 0.0
    %538 = vmatpush1.msra.mxu0 %v178
    %539 = vmatprep.subr.mxu0 0.0
    %540 = vmatpush1.msra.mxu0 %v179
    %541 = vmatprep.subr.mxu0 0.0
    %542 = vmatpush1.msra.mxu0 0.0
    %543 = vmatprep.subr.mxu0 0.0
    %544 = vmatpush1.msra.mxu0 0.0
    %545 = vmatprep.subr.mxu0 0.0
    %546 = vmatpush1.msra.mxu0 0.0
    %547 = vmatprep.subr.mxu0 0.0
    %548 = vmatpush1.msra.mxu0 0.0
    %549 = vmatprep.subr.mxu0 0.0
    %550 = vmatpush1.msra.mxu0 0.0
    %551 = vmatprep.subr.mxu0 0.0
    %552 = vmatpush1.msra.mxu0 0.0
    %553 = vmatprep.subr.mxu0 0.0
    %554 = vmatpush1.msra.mxu0 0.0
    %555 = vmatprep.subr.mxu0 0.0
    %556 = vmatpush1.msra.mxu0 0.0
    %557 = vmatprep.subr.mxu0 0.0
    %558 = vmatpush1.msra.mxu0 0.0
    %559 = vmatprep.subr.mxu0 0.0
    %560 = vmatpush1.msra.mxu0 0.0
    %561 = vmatprep.subr.mxu0 0.0
    %562 = vmatpush1.msra.mxu0 0.0
    %563 = vmatprep.subr.mxu0 0.0
    %564 = vmatpush1.msra.mxu0 0.0
    %565 = vmatprep.subr.mxu0 0.0
    %566 = vmatpush1.msra.mxu0 0.0
    %567 = vmatprep.subr.mxu0 0.0
    %568 = vmatpush1.msra.mxu0 0.0
    %569 = vmatprep.subr.mxu0 0.0
    %570 = vmatpush1.msra.mxu0 0.0
    %571 = vmatprep.subr.mxu0 0.0
    %572 = vmatpush1.msra.mxu0 0.0
    %573 = vmatprep.subr.mxu0 0.0
    %574 = vmatpush1.msra.mxu0 0.0
    %575 = vmatprep.subr.mxu0 0.0
    %576 = vmatpush1.msra.mxu0 0.0
    %577 = vmatprep.subr.mxu0 0.0
    %578 = vmatpush1.msra.mxu0 0.0
    %579 = vmatprep.subr.mxu0 0.0
    %580 = vmatpush1.msra.mxu0 0.0
    %581 = vmatprep.subr.mxu0 0.0
    %582 = vmatpush1.msra.mxu0 0.0
    %583 = vmatprep.subr.mxu0 0.0
    %584 = vmatpush1.msra.mxu0 0.0
    %585 = vmatprep.subr.mxu0 0.0
    %586 = vmatpush1.msra.mxu0 0.0
    %587 = vmatprep.subr.mxu0 0.0
    %588 = vmatpush1.msra.mxu0 0.0
    %589 = vmatprep.mubr.f32.mxu0 0.0
    %590 = vmatmul.mubr.f32.gmra.mrb[0].mxu0 %v523
    %v591 = vpop.f32.mrb[0].mxu0
    %v592 = vadd.f32 0.0, %v591
    %v593 = vpop.f32.mrb[0].mxu0
    %594 = vdwg.mxu0
    %v596 = vrot.slane %v592, 4
    %v597 = vrot.slane %v592, 5
    %v600 = vadd.f32 %v164, %v596
    %v601 = vadd.f32 %v169, %v597
    %v602 = vtanh.pop %v600
    %v603 = vtanh.pop %v601
    %v606 = vrot.slane %v602, 4
    %v607 = vrot.slane %v603, 3
    %v608 = vsel %vm265, %v607, %v606
    %v609 = vsel %vm180, %v608, 0
    %611 = vmatprep.subr.mxu0 0.0
    %612 = vmatpush1.msra.mxu0 %v172
    %613 = vmatprep.subr.mxu0 0.0
    %614 = vmatpush1.msra.mxu0 %v173
    %615 = vmatprep.subr.mxu0 0.0
    %616 = vmatpush1.msra.mxu0 %v174
    %617 = vmatprep.subr.mxu0 0.0
    %618 = vmatpush1.msra.mxu0 %v175
    %619 = vmatprep.subr.mxu0 0.0
    %620 = vmatpush1.msra.mxu0 %v176
    %621 = vmatprep.subr.mxu0 0.0
    %622 = vmatpush1.msra.mxu0 %v177
    %623 = vmatprep.subr.mxu0 0.0
    %624 = vmatpush1.msra.mxu0 %v178
    %625 = vmatprep.subr.mxu0 0.0
    %626 = vmatpush1.msra.mxu0 %v179
    %627 = vmatprep.subr.mxu0 0.0
    %628 = vmatpush1.msra.mxu0 0.0
    %629 = vmatprep.subr.mxu0 0.0
    %630 = vmatpush1.msra.mxu0 0.0
    %631 = vmatprep.subr.mxu0 0.0
    %632 = vmatpush1.msra.mxu0 0.0
    %633 = vmatprep.subr.mxu0 0.0
    %634 = vmatpush1.msra.mxu0 0.0
    %635 = vmatprep.subr.mxu0 0.0
    %636 = vmatpush1.msra.mxu0 0.0
    %637 = vmatprep.subr.mxu0 0.0
    %638 = vmatpush1.msra.mxu0 0.0
    %639 = vmatprep.subr.mxu0 0.0
    %640 = vmatpush1.msra.mxu0 0.0
    %641 = vmatprep.subr.mxu0 0.0
    %642 = vmatpush1.msra.mxu0 0.0
    %643 = vmatprep.subr.mxu0 0.0
    %644 = vmatpush1.msra.mxu0 0.0
    %645 = vmatprep.subr.mxu0 0.0
    %646 = vmatpush1.msra.mxu0 0.0
    %647 = vmatprep.subr.mxu0 0.0
    %648 = vmatpush1.msra.mxu0 0.0
    %649 = vmatprep.subr.mxu0 0.0
    %650 = vmatpush1.msra.mxu0 0.0
    %651 = vmatprep.subr.mxu0 0.0
    %652 = vmatpush1.msra.mxu0 0.0
    %653 = vmatprep.subr.mxu0 0.0
    %654 = vmatpush1.msra.mxu0 0.0
    %655 = vmatprep.subr.mxu0 0.0
    %656 = vmatpush1.msra.mxu0 0.0
    %657 = vmatprep.subr.mxu0 0.0
    %658 = vmatpush1.msra.mxu0 0.0
    %659 = vmatprep.subr.mxu0 0.0
    %660 = vmatpush1.msra.mxu0 0.0
    %661 = vmatprep.subr.mxu0 0.0
    %662 = vmatpush1.msra.mxu0 0.0
    %663 = vmatprep.subr.mxu0 0.0
    %664 = vmatpush1.msra.mxu0 0.0
    %665 = vmatprep.subr.mxu0 0.0
    %666 = vmatpush1.msra.mxu0 0.0
    %667 = vmatprep.subr.mxu0 0.0
    %668 = vmatpush1.msra.mxu0 0.0
    %669 = vmatprep.subr.mxu0 0.0
    %670 = vmatpush1.msra.mxu0 0.0
    %671 = vmatprep.subr.mxu0 0.0
    %672 = vmatpush1.msra.mxu0 0.0
    %673 = vmatprep.subr.mxu0 0.0
    %674 = vmatpush1.msra.mxu0 0.0
    %675 = vmatprep.mubr.f32.mxu0 0.0
    %676 = vmatmul.mubr.f32.gmra.mrb[0].mxu0 %v609
    %v677 = vpop.f32.mrb[0].mxu0
    %v678 = vadd.f32 0.0, %v677
    %v679 = vpop.f32.mrb[0].mxu0
    %680 = vdwg.mxu0
    %v682 = vrot.slane %v678, 3
    %v683 = vrot.slane %v678, 4
    %v686 = vadd.f32 %v164, %v682
    %v687 = vadd.f32 %v169, %v683
    %v688 = vtanh.pop %v686
    %v689 = vtanh.pop %v687
    %v692 = vrot.slane %v688, 5
    %v693 = vrot.slane %v689, 4
    %v694 = vsel %vm265, %v693, %v692
    %v695 = vsel %vm180, %v694, 0
    %697 = vmatprep.subr.mxu0 0.0
    %698 = vmatpush1.msra.mxu0 %v172
    %699 = vmatprep.subr.mxu0 0.0
    %700 = vmatpush1.msra.mxu0 %v173
    %701 = vmatprep.subr.mxu0 0.0
    %702 = vmatpush1.msra.mxu0 %v174
    %703 = vmatprep.subr.mxu0 0.0
    %704 = vmatpush1.msra.mxu0 %v175
    %705 = vmatprep.subr.mxu0 0.0
    %706 = vmatpush1.msra.mxu0 %v176
    %707 = vmatprep.subr.mxu0 0.0
    %708 = vmatpush1.msra.mxu0 %v177
    %709 = vmatprep.subr.mxu0 0.0
    %710 = vmatpush1.msra.mxu0 %v178
    %711 = vmatprep.subr.mxu0 0.0
    %712 = vmatpush1.msra.mxu0 %v179
    %713 = vmatprep.subr.mxu0 0.0
    %714 = vmatpush1.msra.mxu0 0.0
    %715 = vmatprep.subr.mxu0 0.0
    %716 = vmatpush1.msra.mxu0 0.0
    %717 = vmatprep.subr.mxu0 0.0
    %718 = vmatpush1.msra.mxu0 0.0
    %719 = vmatprep.subr.mxu0 0.0
    %720 = vmatpush1.msra.mxu0 0.0
    %721 = vmatprep.subr.mxu0 0.0
    %722 = vmatpush1.msra.mxu0 0.0
    %723 = vmatprep.subr.mxu0 0.0
    %724 = vmatpush1.msra.mxu0 0.0
    %725 = vmatprep.subr.mxu0 0.0
    %726 = vmatpush1.msra.mxu0 0.0
    %727 = vmatprep.subr.mxu0 0.0
    %728 = vmatpush1.msra.mxu0 0.0
    %729 = vmatprep.subr.mxu0 0.0
    %730 = vmatpush1.msra.mxu0 0.0
    %731 = vmatprep.subr.mxu0 0.0
    %732 = vmatpush1.msra.mxu0 0.0
    %733 = vmatprep.subr.mxu0 0.0
    %734 = vmatpush1.msra.mxu0 0.0
    %735 = vmatprep.subr.mxu0 0.0
    %736 = vmatpush1.msra.mxu0 0.0
    %737 = vmatprep.subr.mxu0 0.0
    %738 = vmatpush1.msra.mxu0 0.0
    %739 = vmatprep.subr.mxu0 0.0
    %740 = vmatpush1.msra.mxu0 0.0
    %741 = vmatprep.subr.mxu0 0.0
    %742 = vmatpush1.msra.mxu0 0.0
    %743 = vmatprep.subr.mxu0 0.0
    %744 = vmatpush1.msra.mxu0 0.0
    %745 = vmatprep.subr.mxu0 0.0
    %746 = vmatpush1.msra.mxu0 0.0
    %747 = vmatprep.subr.mxu0 0.0
    %748 = vmatpush1.msra.mxu0 0.0
    %749 = vmatprep.subr.mxu0 0.0
    %750 = vmatpush1.msra.mxu0 0.0
    %751 = vmatprep.subr.mxu0 0.0
    %752 = vmatpush1.msra.mxu0 0.0
    %753 = vmatprep.subr.mxu0 0.0
    %754 = vmatpush1.msra.mxu0 0.0
    %755 = vmatprep.subr.mxu0 0.0
    %756 = vmatpush1.msra.mxu0 0.0
    %757 = vmatprep.subr.mxu0 0.0
    %758 = vmatpush1.msra.mxu0 0.0
    %759 = vmatprep.subr.mxu0 0.0
    %760 = vmatpush1.msra.mxu0 0.0
    %761 = vmatprep.mubr.f32.mxu0 0.0
    %762 = vmatmul.mubr.f32.gmra.mrb[0].mxu0 %v695
    %v763 = vpop.f32.mrb[0].mxu0
    %v764 = vadd.f32 0.0, %v763
    %v765 = vpop.f32.mrb[0].mxu0
    %766 = vdwg.mxu0
    %v768 = vrot.slane %v764, 2
    %v769 = vrot.slane %v764, 3
    %v772 = vadd.f32 %v164, %v768
    %v773 = vadd.f32 %v169, %v769
    %v774 = vtanh.pop %v772
    %v775 = vtanh.pop %v773
    %v778 = vrot.slane %v774, 6
    %v779 = vrot.slane %v775, 5
    %v780 = vsel %vm265, %v779, %v778
    %v781 = vsel %vm180, %v780, 0
    %783 = vmatprep.subr.mxu0 0.0
    %784 = vmatpush1.msra.mxu0 %v172
    %785 = vmatprep.subr.mxu0 0.0
    %786 = vmatpush1.msra.mxu0 %v173
    %787 = vmatprep.subr.mxu0 0.0
    %788 = vmatpush1.msra.mxu0 %v174
    %789 = vmatprep.subr.mxu0 0.0
    %790 = vmatpush1.msra.mxu0 %v175
    %791 = vmatprep.subr.mxu0 0.0
    %792 = vmatpush1.msra.mxu0 %v176
    %793 = vmatprep.subr.mxu0 0.0
    %794 = vmatpush1.msra.mxu0 %v177
    %795 = vmatprep.subr.mxu0 0.0
    %796 = vmatpush1.msra.mxu0 %v178
    %797 = vmatprep.subr.mxu0 0.0
    %798 = vmatpush1.msra.mxu0 %v179
    %799 = vmatprep.subr.mxu0 0.0
    %800 = vmatpush1.msra.mxu0 0.0
    %801 = vmatprep.subr.mxu0 0.0
    %802 = vmatpush1.msra.mxu0 0.0
    %803 = vmatprep.subr.mxu0 0.0
    %804 = vmatpush1.msra.mxu0 0.0
    %805 = vmatprep.subr.mxu0 0.0
    %806 = vmatpush1.msra.mxu0 0.0
    %807 = vmatprep.subr.mxu0 0.0
    %808 = vmatpush1.msra.mxu0 0.0
    %809 = vmatprep.subr.mxu0 0.0
    %810 = vmatpush1.msra.mxu0 0.0
    %811 = vmatprep.subr.mxu0 0.0
    %812 = vmatpush1.msra.mxu0 0.0
    %813 = vmatprep.subr.mxu0 0.0
    %814 = vmatpush1.msra.mxu0 0.0
    %815 = vmatprep.subr.mxu0 0.0
    %816 = vmatpush1.msra.mxu0 0.0
    %817 = vmatprep.subr.mxu0 0.0
    %818 = vmatpush1.msra.mxu0 0.0
    %819 = vmatprep.subr.mxu0 0.0
    %820 = vmatpush1.msra.mxu0 0.0
    %821 = vmatprep.subr.mxu0 0.0
    %822 = vmatpush1.msra.mxu0 0.0
    %823 = vmatprep.subr.mxu0 0.0
    %824 = vmatpush1.msra.mxu0 0.0
    %825 = vmatprep.subr.mxu0 0.0
    %826 = vmatpush1.msra.mxu0 0.0
    %827 = vmatprep.subr.mxu0 0.0
    %828 = vmatpush1.msra.mxu0 0.0
    %829 = vmatprep.subr.mxu0 0.0
    %830 = vmatpush1.msra.mxu0 0.0
    %831 = vmatprep.subr.mxu0 0.0
    %832 = vmatpush1.msra.mxu0 0.0
    %833 = vmatprep.subr.mxu0 0.0
    %834 = vmatpush1.msra.mxu0 0.0
    %835 = vmatprep.subr.mxu0 0.0
    %836 = vmatpush1.msra.mxu0 0.0
    %837 = vmatprep.subr.mxu0 0.0
    %838 = vmatpush1.msra.mxu0 0.0
    %839 = vmatprep.subr.mxu0 0.0
    %840 = vmatpush1.msra.mxu0 0.0
    %841 = vmatprep.subr.mxu0 0.0
    %842 = vmatpush1.msra.mxu0 0.0
    %843 = vmatprep.subr.mxu0 0.0
    %844 = vmatpush1.msra.mxu0 0.0
    %845 = vmatprep.subr.mxu0 0.0
    %846 = vmatpush1.msra.mxu0 0.0
    %847 = vmatprep.mubr.f32.mxu0 0.0
    %848 = vmatmul.mubr.f32.gmra.mrb[0].mxu0 %v781
    %v849 = vpop.f32.mrb[0].mxu0
    %v850 = vadd.f32 0.0, %v849
    %v851 = vpop.f32.mrb[0].mxu0
    %852 = vdwg.mxu0
    %v854 = vrot.slane %v850, 1
    %v855 = vrot.slane %v850, 2
    %v858 = vadd.f32 %v164, %v854
    %v859 = vadd.f32 %v169, %v855
    %v860 = vtanh.pop %v858
    %v861 = vtanh.pop %v859
    %v862 = vld [vmem:[#allocation8] sm:$0xff]
    %v863 = vld [vmem:[#allocation8 + $0x8] sm:$0xff]
    %v864 = vld [vmem:[#allocation8 + $0x10] sm:$0xff]
    %v865 = vld [vmem:[#allocation8 + $0x18] sm:$0xff]
    %v866 = vld [vmem:[#allocation8 + $0x20] sm:$0xff]
    %v867 = vld [vmem:[#allocation8 + $0x28] sm:$0xff]
    %v868 = vld [vmem:[#allocation8 + $0x30] sm:$0xff]
    %v869 = vld [vmem:[#allocation8 + $0x38] sm:$0xff]
    %v870 = vld [vmem:[%s5] sm:$0x1]
    %v872 = vlaneseq
    %v873 = vshrl.u32 %v872, 7
    %v874 = vsub.s32 0, %v873
    %v875 = vrot.slane %v870, %v874
    %v879 = vrot.slane %v860, 7
    %v880 = vrot.slane %v861, 6
    %v881 = vsel %vm265, %v880, %v879
    %v882 = vsel %vm180, %v881, 0
    %884 = vmatprep.subr.mxu0 0.0
    %885 = vmatpush1.msra.mxu0 %v862
    %886 = vmatprep.subr.mxu0 0.0
    %887 = vmatpush1.msra.mxu0 %v863
    %888 = vmatprep.subr.mxu0 0.0
    %889 = vmatpush1.msra.mxu0 %v864
    %890 = vmatprep.subr.mxu0 0.0
    %891 = vmatpush1.msra.mxu0 %v865
    %892 = vmatprep.subr.mxu0 0.0
    %893 = vmatpush1.msra.mxu0 %v866
    %894 = vmatprep.subr.mxu0 0.0
    %895 = vmatpush1.msra.mxu0 %v867
    %896 = vmatprep.subr.mxu0 0.0
    %897 = vmatpush1.msra.mxu0 %v868
    %898 = vmatprep.subr.mxu0 0.0
    %899 = vmatpush1.msra.mxu0 %v869
    %900 = vmatprep.subr.mxu0 0.0
    %901 = vmatpush1.msra.mxu0 0.0
    %902 = vmatprep.subr.mxu0 0.0
    %903 = vmatpush1.msra.mxu0 0.0
    %904 = vmatprep.subr.mxu0 0.0
    %905 = vmatpush1.msra.mxu0 0.0
    %906 = vmatprep.subr.mxu0 0.0
    %907 = vmatpush1.msra.mxu0 0.0
    %908 = vmatprep.subr.mxu0 0.0
    %909 = vmatpush1.msra.mxu0 0.0
    %910 = vmatprep.subr.mxu0 0.0
    %911 = vmatpush1.msra.mxu0 0.0
    %912 = vmatprep.subr.mxu0 0.0
    %913 = vmatpush1.msra.mxu0 0.0
    %914 = vmatprep.subr.mxu0 0.0
    %915 = vmatpush1.msra.mxu0 0.0
    %916 = vmatprep.subr.mxu0 0.0
    %917 = vmatpush1.msra.mxu0 0.0
    %918 = vmatprep.subr.mxu0 0.0
    %919 = vmatpush1.msra.mxu0 0.0
    %920 = vmatprep.subr.mxu0 0.0
    %921 = vmatpush1.msra.mxu0 0.0
    %922 = vmatprep.subr.mxu0 0.0
    %923 = vmatpush1.msra.mxu0 0.0
    %924 = vmatprep.subr.mxu0 0.0
    %925 = vmatpush1.msra.mxu0 0.0
    %926 = vmatprep.subr.mxu0 0.0
    %927 = vmatpush1.msra.mxu0 0.0
    %928 = vmatprep.subr.mxu0 0.0
    %929 = vmatpush1.msra.mxu0 0.0
    %930 = vmatprep.subr.mxu0 0.0
    %931 = vmatpush1.msra.mxu0 0.0
    %932 = vmatprep.subr.mxu0 0.0
    %933 = vmatpush1.msra.mxu0 0.0
    %934 = vmatprep.subr.mxu0 0.0
    %935 = vmatpush1.msra.mxu0 0.0
    %936 = vmatprep.subr.mxu0 0.0
    %937 = vmatpush1.msra.mxu0 0.0
    %938 = vmatprep.subr.mxu0 0.0
    %939 = vmatpush1.msra.mxu0 0.0
    %940 = vmatprep.subr.mxu0 0.0
    %941 = vmatpush1.msra.mxu0 0.0
    %942 = vmatprep.subr.mxu0 0.0
    %943 = vmatpush1.msra.mxu0 0.0
    %944 = vmatprep.subr.mxu0 0.0
    %945 = vmatpush1.msra.mxu0 0.0
    %946 = vmatprep.subr.mxu0 0.0
    %947 = vmatpush1.msra.mxu0 0.0
    %948 = vmatprep.mubr.f32.mxu0 0.0
    %949 = vmatmul.mubr.f32.gmra.mrb[0].mxu0 %v882
    %v950 = vpop.f32.mrb[0].mxu0
    %v951 = vadd.f32 %v875, %v950
    %v952 = vpop.f32.mrb[0].mxu0
    %953 = vdwg.mxu0
    %954 = vst [vmem:[#allocation10] sm:$0x3] %v951
    // Predicated region
    $region42: #{tpu_custom_call.1} parent=1 // pred_check
      _
    $region43: #{tpu_custom_call.1} parent=1 // pred_check_branch
      %956 = sbr.rel (0) target = $region45
    $region44: #{tpu_custom_call.1} parent=1 // pred_region
      %s958 = ssub.s32 32, 32
      %959 = vsyncadd [#allocation4], %s958
      %s961 = sshll.u32 [#allocation10], 4
      %s962 = int_to_ptr.vmem [resolvable:$true] %s961
      %964 = dma.vmem_to_hbm [thread:$0]  %s962, 32, %s6, [#allocation4]
    $region45: #{tpu_custom_call.1} parent=1 // pred_fallthru
      _
    // Predicated region
    $region46: #{tpu_custom_call.1} parent=1 // pred_check
      _
    $region47: #{tpu_custom_call.1} parent=1 // pred_check_branch
      %966 = sbr.rel (0) target = $region49
    $region48: #{tpu_custom_call.1} parent=1 // pred_region
      %967 = dma.done [#allocation4], 32
    $region49: #{tpu_custom_call.1} parent=1 // pred_fallthru
      _
    %968 = vsyncpa [#allocation3], 1
    %969 = vsyncpa [#allocation6], 1
    %970 = vsyncpa [#allocation9], 1
    %971 = vsyncpa [#allocation4], 1

</llo_original>
